<compile_context>
chip_gen: v5e
topology: v5e:2x2
jax: 0.10.0
libtpu: 0.0.40
codegen_flags: <defaults>
</compile_context>

<pallas_src>
import functools

import jax
import jax.numpy as jnp
from jax.experimental import pallas as pl
from jax.experimental.pallas import tpu as pltpu


# ----------------------------------------------------------------------------
# Pallas kernel: per-row sum of squared errors over the lane (last) axis
# ----------------------------------------------------------------------------
def _row_sse_kernel(p_ref, t_ref, o_ref, acc_ref, *, n_total, tile_n):
    nk = pl.program_id(1)
    last = pl.num_programs(1) - 1

    @pl.when(nk == 0)
    def _():
        acc_ref[...] = jnp.zeros_like(acc_ref)

    def _accum(mask_tail):
        d = p_ref[...].astype(jnp.float32) - t_ref[...].astype(jnp.float32)
        if mask_tail:
            # Only the final (partial) lane tile pays iota+cmp+select.
            col = nk * tile_n + jax.lax.broadcasted_iota(jnp.int32, d.shape, 1)
            d = jnp.where(col < n_total, d, 0.0)
        # Narrow accumulator: per-row partial sum, no full-tile VMEM RMW.
        acc_ref[...] += jnp.sum(d * d, axis=-1, keepdims=True)

    if n_total % tile_n != 0:
        @pl.when(nk < last)
        def _():
            _accum(False)

        @pl.when(nk == last)
        def _():
            _accum(True)
    else:
        _accum(False)

    @pl.when(nk == last)
    def _():
        o_ref[...] = acc_ref[...]


# ----------------------------------------------------------------------------
# Tiling helpers (generation-aware)
# ----------------------------------------------------------------------------
def _vmem_capacity_bytes() -> int:
    try:
        return int(pltpu.get_tpu_info().vmem_capacity_bytes)
    except Exception:
        return 128 << 20  # conservative fallback (v5e/v6e-like)


def _pick_tile_r(R: int) -> int:
    """Multiple-of-8 divisor of R (<=64); prefer >=2 row blocks for v7x 2-TC."""
    if R < 8 or R % 8 != 0:
        return R  # full-dim block (block dim == array dim is allowed)
    divisors = [t for t in range(8, min(R, 64) + 1, 8) if R % t == 0]
    multi = [t for t in divisors if R // t >= 2]
    return (multi or divisors)[-1]


def per_row_sse(pred_rn: jax.Array, target_rn: jax.Array):
    """pred_rn/target_rn: [R, N] -> per-row sum((p - t)^2), shape [R] (f32)."""
    R, N = pred_rn.shape

    vmem_cap = _vmem_capacity_bytes()
    if vmem_cap >= (100 << 20):
        # v5e / v6e: 128 MiB physical VMEM; raise the scoped limit so the big
        # tile fits v5e's 16 MiB default (48 MiB is safe even if misdetected).
        input_budget = 32 << 20
        vmem_limit = 48 << 20
    else:
        # v7x: 64 MiB physical per TC; stay under the 32 MiB scoped default.
        input_budget = 24 << 20
        vmem_limit = None

    tile_r = _pick_tile_r(R)

    # Double-buffered input bytes per (row, lane) element of the tile.
    bytes_per_rc = 2 * (jnp.dtype(pred_rn.dtype).itemsize
                        + jnp.dtype(target_rn.dtype).itemsize)
    max_n_budget = input_budget // max(1, tile_r * bytes_per_rc)
    max_n_budget = max(128, (max_n_budget // 128) * 128)
    tile_n = min(pl.cdiv(N, 128) * 128, max_n_budget, 32 * 1024)

    grid = (pl.cdiv(R, tile_r), pl.cdiv(N, tile_n))
    kernel = functools.partial(_row_sse_kernel, n_total=N, tile_n=tile_n)

    cost = pl.CostEstimate(
        flops=3 * R * N,
        transcendentals=0,
        bytes_accessed=(jnp.dtype(pred_rn.dtype).itemsize * R * N
                        + jnp.dtype(target_rn.dtype).itemsize * R * N
                        + R * 4),
    )

    out = pl.pallas_call(
        kernel,
        out_shape=jax.ShapeDtypeStruct((R, 1), jnp.float32),
        grid_spec=pltpu.PrefetchScalarGridSpec(
            num_scalar_prefetch=0,
            grid=grid,
            in_specs=[
                pl.BlockSpec((tile_r, tile_n), lambda r, k: (r, k)),
                pl.BlockSpec((tile_r, tile_n), lambda r, k: (r, k)),
            ],
            out_specs=pl.BlockSpec((tile_r, 1), lambda r, k: (r, 0)),
            scratch_shapes=[pltpu.VMEM((tile_r, 1), jnp.float32)],
        ),
        compiler_params=pltpu.CompilerParams(
            dimension_semantics=("parallel", "arbitrary"),
            vmem_limit_bytes=vmem_limit,
        ),
        cost_estimate=cost,
    )(pred_rn, target_rn)
    return out[:, 0]


# ----------------------------------------------------------------------------
# Loss modules (forward-pass equivalents)
# ----------------------------------------------------------------------------
class RegressionLoss:
    def __init__(self, loss_weight, reduction: str = "mean"):
        assert reduction in ("mean", "sum")
        self.weights = jnp.asarray([float(w) for w in loss_weight], jnp.float32)
        self.reduction = reduction

    def __call__(self, pred, target):
        # pred/target: [B, C, H, W]; MSE per-channel over pred[:, i].
        B, C, H, W = pred.shape
        assert C == self.weights.shape[0]
        # Zero-copy reshape: rows are (batch, channel) pairs.
        sse_rows = per_row_sse(pred.reshape(B * C, H * W),
                               target.reshape(B * C, H * W))           # [B*C]
        sse_c = sse_rows.reshape(B, C).sum(axis=0)                     # [C]
        if self.reduction == "mean":
            per_ch = sse_c / float(B * H * W)
        else:
            per_ch = sse_c
        weighted_vec = per_ch * self.weights
        loss = jnp.zeros((1,), jnp.float32) + weighted_vec.sum()
        unweighted = [per_ch[i] for i in range(C)]
        weighted = [weighted_vec[i] for i in range(C)]
        return loss, unweighted, weighted


class UncertaintyLoss:
    def __init__(self, out_channel: int, reduction: str = "mean", key=None):
        assert reduction in ("mean", "sum")
        if key is None:
            key = jax.random.PRNGKey(42)
        # nn.Parameter(torch.randn(out_channel)) -> deterministic normal init.
        self.sigma = jax.random.normal(key, (out_channel,), jnp.float32)
        self.out_channel = out_channel
        self.reduction = reduction

    def __call__(self, pred, target):
        # Each mse[i] in the torch code is the MSE over the FULL pred/target.
        B, C, H, W = pred.shape
        sse_rows = per_row_sse(pred.reshape(B * C, H * W),
                               target.reshape(B * C, H * W))           # [B*C]
        total_sse = sse_rows.sum()
        if self.reduction == "mean":
            full_mse = total_sse / float(B * C * H * W)
        else:
            full_mse = total_sse
        inv_var = 1.0 / (2.0 * self.sigma ** 2)                        # [out_ch]
        weighted_vec = full_mse * inv_var
        # log(prod(sigma^2)) == sum(log(sigma^2)), numerically safer.
        log_term = jnp.sum(jnp.log(self.sigma ** 2))
        loss = jnp.zeros((1,), jnp.float32) + (weighted_vec.sum() + log_term)
        unweighted = [full_mse for _ in range(self.out_channel)]
        weighted = [weighted_vec[i] for i in range(self.out_channel)]
        return loss, unweighted, weighted


class Loss:
    def __init__(self, loss_fun_name: str, out_channel: int, loss_weight,
                 reduction: str = "mean"):
        assert loss_fun_name in ("regression", "uncertainty"), \
            "[Error] loss_fun_name must be regression or uncertainty"
        if loss_fun_name == "regression":
            self.loss = RegressionLoss(loss_weight, reduction)
        else:
            print("[Info] Using uncertainty loss, loss_weight is ignored")
            self.loss = UncertaintyLoss(out_channel)

    def __call__(self, pred, target):
        return self.loss(pred, target)


# ----------------------------------------------------------------------------
# Main
# ----------------------------------------------------------------------------
if __name__ == "__main__":
    key = jax.random.PRNGKey(0)
    kp, kt = jax.random.split(key)

    B, C, H, W = 2, 4, 16, 16
    pred = jax.random.normal(kp, (B, C, H, W), jnp.float32)
    target = jax.random.normal(kt, (B, C, H, W), jnp.float32)

    # --- regression loss ---
    weights = [1.0, 0.5, 2.0, 0.25]
    reg = Loss("regression", out_channel=C, loss_weight=weights)
    loss_r, unw_r, w_r = reg(pred, target)
    jax.block_until_ready(loss_r)

    # reference check (plain jnp)
    ref_unw = [jnp.mean((pred[:, i] - target[:, i]) ** 2) for i in range(C)]
    ref_loss = sum(w * u for w, u in zip(weights, ref_unw))
    assert loss_r.shape == (1,)
    assert jnp.allclose(loss_r[0], ref_loss, rtol=1e-5, atol=1e-5)
    for a, b in zip(unw_r, ref_unw):
        assert jnp.allclose(a, b, rtol=1e-5, atol=1e-5)

    # --- uncertainty loss ---
    unc = Loss("uncertainty", out_channel=C, loss_weight=[])
    loss_u, unw_u, w_u = unc(pred, target)
    jax.block_until_ready(loss_u)

    full_mse = jnp.mean((pred - target) ** 2)
    sigma = unc.loss.sigma
    ref_u = sum(full_mse * (1.0 / (2.0 * sigma[i] ** 2)) for i in range(C)) \
        + jnp.sum(jnp.log(sigma ** 2))
    assert jnp.allclose(loss_u[0], ref_u, rtol=1e-5, atol=1e-5)
    for a in unw_u:
        assert jnp.allclose(a, full_mse, rtol=1e-5, atol=1e-5)

    print("KERNEL_OK")
</pallas_src>

<mosaic_0001>
module attributes {stable_mosaic.version = 11 : i64} {
  func.func @_row_sse_kernel(%arg0: i32, %arg1: i32, %arg2: memref<8x256xf32, #tpu.memory_space<vmem>>, %arg3: memref<8x256xf32, #tpu.memory_space<vmem>>, %arg4: memref<8x1xf32, #tpu.memory_space<vmem>>, %arg5: memref<8x1xf32, #tpu.memory_space<vmem>>) attributes {dimension_semantics = [#tpu.dimension_semantics<parallel>, #tpu.dimension_semantics<arbitrary>], iteration_bounds = array<i64: 1, 1>, scalar_prefetch = 0 : i64, scratch_operands = 1 : i64, tpu.core_type = #tpu.core_type<tc>, window_params = [{transform_indices = @transform_0, window_bounds = array<i64: 8, 256>}, {transform_indices = @transform_1, window_bounds = array<i64: 8, 256>}, {transform_indices = @transform_2, window_bounds = array<i64: 8, 1>}]} {
    %c0_i32 = arith.constant 0 : i32
    %0 = arith.cmpi eq, %arg1, %c0_i32 : i32
    %1 = arith.extui %0 : i1 to i32
    %c0_i32_0 = arith.constant 0 : i32
    %2 = arith.cmpi ne, %1, %c0_i32_0 : i32
    scf.if %2 {
      %cst_10 = arith.constant 0.000000e+00 : f32
      %15 = vector.broadcast %cst_10 : f32 to vector<8x1xf32>
      %c0_11 = arith.constant 0 : index
      %c0_12 = arith.constant 0 : index
      %16 = vector.load %arg5[%c0_11, %c0_12] : memref<8x1xf32, #tpu.memory_space<vmem>>, vector<8x1xf32>
      tpu.vector_store %arg5[%c0_11, %c0_12], %15 {strides = array<i32>} : memref<8x1xf32, #tpu.memory_space<vmem>>, vector<8x1xf32>,
    } else {
    }
    %c0 = arith.constant 0 : index
    %c0_1 = arith.constant 0 : index
    %3 = vector.load %arg2[%c0, %c0_1] : memref<8x256xf32, #tpu.memory_space<vmem>>, vector<8x256xf32>
    %c0_2 = arith.constant 0 : index
    %c0_3 = arith.constant 0 : index
    %4 = vector.load %arg3[%c0_2, %c0_3] : memref<8x256xf32, #tpu.memory_space<vmem>>, vector<8x256xf32>
    %5 = arith.subf %3, %4 : vector<8x256xf32>
    %c0_4 = arith.constant 0 : index
    %c0_5 = arith.constant 0 : index
    %6 = vector.load %arg5[%c0_4, %c0_5] : memref<8x1xf32, #tpu.memory_space<vmem>>, vector<8x1xf32>
    %7 = arith.mulf %5, %5 : vector<8x256xf32>
    %cst = arith.constant dense<0.000000e+00> : vector<8xf32>
    %8 = vector.multi_reduction <add>, %7, %cst [1] : vector<8x256xf32> to vector<8xf32>
    %9 = vector.shape_cast %8 : vector<8xf32> to vector<8x1xf32>
    %10 = arith.addf %6, %9 : vector<8x1xf32>
    %c0_6 = arith.constant 0 : index
    %c0_7 = arith.constant 0 : index
    %11 = vector.load %arg5[%c0_6, %c0_7] : memref<8x1xf32, #tpu.memory_space<vmem>>, vector<8x1xf32>
    tpu.vector_store %arg5[%c0_6, %c0_7], %10 {strides = array<i32>} : memref<8x1xf32, #tpu.memory_space<vmem>>, vector<8x1xf32>,
    %c0_i32_8 = arith.constant 0 : i32
    %12 = arith.cmpi eq, %arg1, %c0_i32_8 : i32
    %13 = arith.extui %12 : i1 to i32
    %c0_i32_9 = arith.constant 0 : i32
    %14 = arith.cmpi ne, %13, %c0_i32_9 : i32
    scf.if %14 {
      %c0_10 = arith.constant 0 : index
      %c0_11 = arith.constant 0 : index
      %15 = vector.load %arg5[%c0_10, %c0_11] : memref<8x1xf32, #tpu.memory_space<vmem>>, vector<8x1xf32>
      %c0_12 = arith.constant 0 : index
      %c0_13 = arith.constant 0 : index
      %16 = vector.load %arg4[%c0_12, %c0_13] : memref<8x1xf32, #tpu.memory_space<vmem>>, vector<8x1xf32>
      tpu.vector_store %arg4[%c0_12, %c0_13], %15 {strides = array<i32>} : memref<8x1xf32, #tpu.memory_space<vmem>>, vector<8x1xf32>,
    } else {
    }
    return
  }
  func.func @transform_0(%arg0: i32, %arg1: i32) -> (i32, i32) {
    %c0_i32 = arith.constant 0 : i32
    return %arg0, %arg1 : i32, i32
  }
  func.func @transform_1(%arg0: i32, %arg1: i32) -> (i32, i32) {
    %c0_i32 = arith.constant 0 : i32
    return %arg0, %arg1 : i32, i32
  }
  func.func @transform_2(%arg0: i32, %arg1: i32) -> (i32, i32) {
    %c0_i32 = arith.constant 0 : i32
    %c0_i32_0 = arith.constant 0 : i32
    return %arg0, %c0_i32 : i32, i32
  }
}

</mosaic_0001>

<llo_original>
// kernel: tpu_custom_call.1
$region0: #{tpu_custom_call.1}
  #allocation0 [shape = 'u32[]', space=smem, size = 0x4, offset = 0x4, fixed_abs, tag = 'smem constant byte address 0x4 - core index']
  #allocation1 [shape = 'u32[72,128]{1,0:T(1,128)}', space=vmem, size = 0x9000, scoped, tag = 'internal scratch']
  #allocation2 [shape = 'f32[8,1]{1,0:T(8,128)}', space=vmem, size = 0x1000, scoped, tag = 'scratch operand']
  %s0 = inlined_call_operand.hbm [shape: f32[8,256], index: 0, kind: input, shape index: {}]
  %s1 = inlined_call_operand.hbm [shape: f32[8,256], index: 1, kind: input, shape index: {}]
  %s2 = inlined_call_operand.vmem [shape: f32[8,1], index: 2, kind: output, shape index: {}]
  %s3 = sld [smem:[#allocation0]]
  $region34: #{tpu_custom_call.1} parent=0
    _
  %s5 = ssub.s32 1, %s3
  %s6 = scalar_select 0, %s5, %s3
  $region1: #{tpu_custom_call.1} parent=0
    #allocation3 [shape = 'u8[8192]{0}', space=vmem, size = 0x2000, scoped, tag = 'input window, operand 0, single buffered']
    #allocation4 [shape = 's32[1]{0}', space=sflag, size = 0x4, scoped, tag = 'scoped memory for tpu_custom_call.1']
    #allocation5 [shape = 'u8[8192]{0}', space=vmem, size = 0x2000, scoped, tag = 'input window, operand 1, single buffered']
    #allocation6 [shape = 's32[1]{0}', space=sflag, size = 0x4, scoped, tag = 'scoped memory for tpu_custom_call.1']
    %7 = vsyncpa [#allocation4], 0
    %8 = vsyncpa [#allocation6], 0
    // Predicated region
    $region2: #{tpu_custom_call.1} parent=1 // pred_check
      _
    $region3: #{tpu_custom_call.1} parent=1 // pred_check_branch
      %10 = sbr.rel (0) target = $region5
    $region4: #{tpu_custom_call.1} parent=1 // pred_region
      %12 = vsyncadd [#allocation4], 0
      %s14 = sshll.u32 %s0, 4
      %s15 = int_to_ptr.hbm [resolvable:$true] %s14
      %s16 = sshll.u32 [#allocation3], 4
      %s17 = int_to_ptr.vmem [resolvable:$true] %s16
      %19 = dma.hbm_to_vmem [thread:$0]  %s15, 256, %s17, [#allocation4]
    $region5: #{tpu_custom_call.1} parent=1 // pred_fallthru
      _
    // Predicated region
    $region6: #{tpu_custom_call.1} parent=1 // pred_check
      _
    $region7: #{tpu_custom_call.1} parent=1 // pred_check_branch
      %21 = sbr.rel (0) target = $region9
    $region8: #{tpu_custom_call.1} parent=1 // pred_region
      %23 = vsyncadd [#allocation6], 0
      %s25 = sshll.u32 %s1, 4
      %s26 = int_to_ptr.hbm [resolvable:$true] %s25
      %s27 = sshll.u32 [#allocation5], 4
      %s28 = int_to_ptr.vmem [resolvable:$true] %s27
      %30 = dma.hbm_to_vmem [thread:$0]  %s26, 256, %s28, [#allocation6]
    $region9: #{tpu_custom_call.1} parent=1 // pred_fallthru
      _
    // Predicated region
    $region10: #{tpu_custom_call.1} parent=1 // pred_check
      _
    $region11: #{tpu_custom_call.1} parent=1 // pred_check_branch
      %32 = sbr.rel (0) target = $region13
    $region12: #{tpu_custom_call.1} parent=1 // pred_region
      %34 = dma.done [#allocation4], 256
    $region13: #{tpu_custom_call.1} parent=1 // pred_fallthru
      _
    // Predicated region
    $region14: #{tpu_custom_call.1} parent=1 // pred_check
      _
    $region15: #{tpu_custom_call.1} parent=1 // pred_check_branch
      %36 = sbr.rel (0) target = $region17
    $region16: #{tpu_custom_call.1} parent=1 // pred_region
      %38 = dma.done [#allocation6], 256
    $region17: #{tpu_custom_call.1} parent=1 // pred_fallthru
      _
    %p39 = scmp.eq.s32.totalorder 0, 0
    // Predicated region
    $region18: #{tpu_custom_call.1} parent=1 // pred_check
      %p40 = pneg %p39
    $region19: #{tpu_custom_call.1} parent=1 // pred_check_branch
      %42 = sbr.rel (%p40) target = $region21
    $region20: #{tpu_custom_call.1} parent=1 // pred_region
      %vm43 = vcmask 7168
      %44 = vst.msk [vmem:[#allocation2] sm:$0xff] %vm43, 0.0
    $region21: #{tpu_custom_call.1} parent=1 // pred_fallthru
      _
    %v45 = vld [vmem:[#allocation3] sm:$0xff]
    %v46 = vld [vmem:[#allocation3 + $0x8] sm:$0xff]
    %v47 = vld [vmem:[#allocation5] sm:$0xff]
    %v48 = vld [vmem:[#allocation5 + $0x8] sm:$0xff]
    %v49 = vsub.f32 %v45, %v47
    %v50 = vsub.f32 %v46, %v48
    %v51 = vld [vmem:[#allocation2] sm:$0xff]
    %v52 = vmul.f32 %v49, %v49
    %v53 = vmul.f32 %v50, %v50
    %v54 = vadd.f32 %v52, %v53
    %55 = vadd.xlane.f32.xlu0 %v54
    %v56 = vpop.xlane.xlu0 %55
    %v57 = vadd.f32 %v51, %v56
    %vm58 = vcmask 7168
    %59 = vst.msk [vmem:[#allocation2] sm:$0xff] %vm58, %v57
    // Predicated region
    $region22: #{tpu_custom_call.1} parent=1 // pred_check
      %p60 = pneg %p39
    $region23: #{tpu_custom_call.1} parent=1 // pred_check_branch
      %62 = sbr.rel (%p60) target = $region25
    $region24: #{tpu_custom_call.1} parent=1 // pred_region
      %v63 = vld [vmem:[#allocation2] sm:$0xff]
      %64 = vst.msk [vmem:[%s2] sm:$0xff] %vm58, %v63
    $region25: #{tpu_custom_call.1} parent=1 // pred_fallthru
      _
    // Predicated region
    $region26: #{tpu_custom_call.1} parent=1 // pred_check
      _
    $region27: #{tpu_custom_call.1} parent=1 // pred_check_branch
      %66 = sbr.rel (0) target = $region29
    $region28: #{tpu_custom_call.1} parent=1 // pred_region
      _
    $region29: #{tpu_custom_call.1} parent=1 // pred_fallthru
      _
    // Predicated region
    $region30: #{tpu_custom_call.1} parent=1 // pred_check
      _
    $region31: #{tpu_custom_call.1} parent=1 // pred_check_branch
      %68 = sbr.rel (0) target = $region33
    $region32: #{tpu_custom_call.1} parent=1 // pred_region
      _
    $region33: #{tpu_custom_call.1} parent=1 // pred_fallthru
      _
    %69 = vsyncpa [#allocation4], 1
    %70 = vsyncpa [#allocation6], 1

</llo_original>
